<compile_context>
chip_gen: v7x
topology: tpu7x:2x2x1
jax: 0.10.0
libtpu: 0.0.40
codegen_flags: <defaults>
</compile_context>

<pallas_src>
import functools

import jax
import jax.numpy as jnp
from jax import lax
from jax.experimental import pallas as pl
from jax.experimental.pallas import tpu as pltpu


_VMEM_LIMIT = 48 * 1024 * 1024      # > 16/32 MiB defaults, < v7x 64 MiB physical
_SINGLE_BLOCK_MAX_N = 1024          # (N, N) f32 working set fits comfortably


# ---------------------------------------------------------------------------
# Fused path: whole matrix in VMEM, one HBM read of `sim`.
# ---------------------------------------------------------------------------
def _fused_kernel(sim_ref, out_ref, *, inv_temp, n_rows):
    s = sim_ref[...].astype(jnp.float32)                        # (N, N)
    x = s * inv_temp

    # Column softmax folded into s2 = s * softmax_col(x) * N.
    cmax = jnp.max(x, axis=0, keepdims=True)                    # (1, N)
    e = jnp.exp(x - cmax)                                       # (N, N)
    csum = jnp.sum(e, axis=0, keepdims=True)                    # (1, N)
    r = pl.reciprocal(csum, approx=True)                        # EUP slot
    r = r * (2.0 - csum * r)                                    # Newton -> f32 acc.
    s2 = s * (e * (r * jnp.float32(n_rows)))                    # (N, N)

    # Diagonal of the row log-softmax only.
    row_max = jnp.max(s2, axis=-1, keepdims=True)               # (N, 1)
    lse = jnp.log(jnp.sum(jnp.exp(s2 - row_max), axis=-1, keepdims=True))
    rows = lax.broadcasted_iota(jnp.int32, s2.shape, 0)
    cols = lax.broadcasted_iota(jnp.int32, s2.shape, 1)
    diag = jnp.sum(jnp.where(rows == cols, s2, 0.0), axis=-1, keepdims=True)
    out_ref[...] = -(diag - row_max - lse)                      # (N, 1)


# ---------------------------------------------------------------------------
# Pass 1: per-column max and folded column-softmax scale (N / sum_col exp(.))
# ---------------------------------------------------------------------------
def _col_stats_kernel(sim_ref, cmax_ref, cscale_ref, *, inv_temp, n_rows, mask_tail):
    i = pl.program_id(0)
    tile_rows = sim_ref.shape[0]

    @pl.when(i == 0)
    def _init():
        cmax_ref[...] = jnp.full(cmax_ref.shape, -jnp.inf, cmax_ref.dtype)
        cscale_ref[...] = jnp.zeros(cscale_ref.shape, cscale_ref.dtype)

    x = sim_ref[...].astype(jnp.float32) * inv_temp                  # (T, N)
    if mask_tail:
        # Rows of the (padded) last tile beyond N must not contribute.
        row_ids = i * tile_rows + lax.broadcasted_iota(jnp.int32, x.shape, 0)
        x = jnp.where(row_ids < n_rows, x, -jnp.inf)

    # Online column-softmax statistics accumulated in the resident outputs.
    tile_max = jnp.max(x, axis=0, keepdims=True)                     # (1, N)
    new_max = jnp.maximum(cmax_ref[...], tile_max)                   # (1, N)
    tile_sum = jnp.sum(jnp.exp(x - new_max), axis=0, keepdims=True)  # (1, N)
    cscale_ref[...] = cscale_ref[...] * jnp.exp(cmax_ref[...] - new_max) + tile_sum
    cmax_ref[...] = new_max

    @pl.when(i == pl.num_programs(0) - 1)
    def _finalize():
        csum = cscale_ref[...]
        r = pl.reciprocal(csum, approx=True)       # EUP slot (nearly free)
        r = r * (2.0 - csum * r)                   # one Newton step -> f32 accuracy
        cscale_ref[...] = r * jnp.float32(n_rows)  # fold the *N rescale in too


# ---------------------------------------------------------------------------
# Pass 2: diagonal of the row log-softmax of the rescaled similarity matrix
# ---------------------------------------------------------------------------
def _loss_kernel(sim_ref, cmax_ref, cscale_ref, out_ref, *, inv_temp):
    i = pl.program_id(0)
    tile_rows = sim_ref.shape[0]
    s = sim_ref[...].astype(jnp.float32)                             # (T, N)

    # s2 = s * softmax_col(s/temp) * N with the column softmax folded into the
    # (1, N) vectors col_max / col_scale from pass 1.
    e = jnp.exp(s * inv_temp - cmax_ref[...])                        # (T, N)
    s2 = s * (e * cscale_ref[...])                                   # (T, N)

    # Row log-softmax, but only its diagonal: never build z / logpt matrices.
    row_max = jnp.max(s2, axis=-1, keepdims=True)                    # (T, 1)
    lse = jnp.log(jnp.sum(jnp.exp(s2 - row_max), axis=-1, keepdims=True))

    cols = lax.broadcasted_iota(jnp.int32, s2.shape, 1)
    rows_g = i * tile_rows + lax.broadcasted_iota(jnp.int32, s2.shape, 0)
    diag = jnp.sum(jnp.where(cols == rows_g, s2, 0.0), axis=-1, keepdims=True)

    out_ref[...] = -(diag - row_max - lse)                           # (T, 1)


# ---------------------------------------------------------------------------
# Wrapper
# ---------------------------------------------------------------------------
def dual_softmax(sim_matrix, temp=1000.0, *, tile_rows=256,
                 single_block_max_n=_SINGLE_BLOCK_MAX_N):
    """Pallas TPU implementation of DualSoftmax.forward.

    Args:
      sim_matrix: (N, N) similarity matrix (any float dtype; cast to f32
        inside the kernel -- no wrapper-side cast / extra HBM copy).
      temp: smoothing temperature (1000 during training, 1 at inference).
      tile_rows: row-tile size for the two-pass (large-N) grid; rounded to the
        sublane alignment of the input dtype.
      single_block_max_n: N at or below which the single-VMEM-block fused
        kernel is used (one HBM read of sim).

    Returns:
      (N,) float32 loss, loss[i] = -log_softmax(rescaled_sim, -1)[i, i].
    """
    n, m = sim_matrix.shape
    assert n == m, "DualSoftmax expects a square similarity matrix"
    inv_temp = 1.0 / float(temp)

    # ---- fused single-block path (typical contrastive batch sizes) ----
    if n <= single_block_max_n:
        out = pl.pallas_call(
            functools.partial(_fused_kernel, inv_temp=inv_temp, n_rows=n),
            out_shape=jax.ShapeDtypeStruct((n, 1), jnp.float32),
            compiler_params=pltpu.CompilerParams(vmem_limit_bytes=_VMEM_LIMIT),
        )(sim_matrix)
        return out.reshape(n)

    # ---- tiled two-pass path for large N ----
    sublane_align = 16 if jnp.dtype(sim_matrix.dtype).itemsize < 4 else 8
    if n <= tile_rows:
        tile = n
    else:
        tile = max(sublane_align,
                   (int(tile_rows) // sublane_align) * sublane_align)
    num_tiles = pl.cdiv(n, tile)
    mask_tail = (n % tile) != 0

    # pass 1: column statistics (sequential online reduction over row tiles)
    col_max, col_scale = pl.pallas_call(
        functools.partial(_col_stats_kernel, inv_temp=inv_temp, n_rows=n,
                          mask_tail=mask_tail),
        grid=(num_tiles,),
        in_specs=[pl.BlockSpec((tile, n), lambda i: (i, 0))],
        out_specs=(pl.BlockSpec((1, n), lambda i: (0, 0)),
                   pl.BlockSpec((1, n), lambda i: (0, 0))),
        out_shape=(jax.ShapeDtypeStruct((1, n), jnp.float32),
                   jax.ShapeDtypeStruct((1, n), jnp.float32)),
        compiler_params=pltpu.CompilerParams(
            dimension_semantics=("arbitrary",),
            vmem_limit_bytes=_VMEM_LIMIT),
    )(sim_matrix)

    # pass 2: per-row loss (independent row tiles -> parallel axis)
    out = pl.pallas_call(
        functools.partial(_loss_kernel, inv_temp=inv_temp),
        grid=(num_tiles,),
        in_specs=[pl.BlockSpec((tile, n), lambda i: (i, 0)),
                  pl.BlockSpec((1, n), lambda i: (0, 0)),
                  pl.BlockSpec((1, n), lambda i: (0, 0))],
        out_specs=pl.BlockSpec((tile, 1), lambda i: (i, 0)),
        out_shape=jax.ShapeDtypeStruct((num_tiles * tile, 1), jnp.float32),
        compiler_params=pltpu.CompilerParams(
            dimension_semantics=("parallel",),
            vmem_limit_bytes=_VMEM_LIMIT),
    )(sim_matrix, col_max, col_scale)

    # Drop the padded tail rows of the last tile.
    return out.reshape(-1)[:n]


def _reference(sim_matrix, temp=1000.0):
    """Pure-JAX reference mirroring the PyTorch module exactly."""
    s = sim_matrix.astype(jnp.float32)
    n = s.shape[0]
    s = s * jax.nn.softmax(s / temp, axis=0) * n
    logpt = jax.nn.log_softmax(s, axis=-1)
    return -jnp.diag(logpt)


if __name__ == "__main__":
    key = jax.random.PRNGKey(0)

    # Case 1: small square similarity matrix -> fused single-block path.
    N = 8
    sim = jax.random.normal(key, (N, N), dtype=jnp.float32)
    loss = dual_softmax(sim, temp=1000.0)
    jax.block_until_ready(loss)
    ref = _reference(sim, temp=1000.0)
    assert loss.shape == (N,)
    assert jnp.allclose(loss, ref, atol=1e-3, rtol=1e-3), (loss, ref)

    # Case 2: force the tiled two-pass path (3 row tiles, masked partial tail).
    N2 = 40
    sim2 = jax.random.normal(jax.random.PRNGKey(1), (N2, N2), dtype=jnp.float32)
    loss2 = dual_softmax(sim2, temp=1000.0, tile_rows=16, single_block_max_n=0)
    jax.block_until_ready(loss2)
    ref2 = _reference(sim2, temp=1000.0)
    assert loss2.shape == (N2,)
    assert jnp.allclose(loss2, ref2, atol=1e-3, rtol=1e-3), (loss2, ref2)

    # Case 3: bf16 input, tiled path, exact tile divisor, inference temp=1.
    N3 = 48
    sim3 = jax.random.normal(jax.random.PRNGKey(2), (N3, N3), dtype=jnp.bfloat16)
    loss3 = dual_softmax(sim3, temp=1.0, tile_rows=16, single_block_max_n=0)
    jax.block_until_ready(loss3)
    ref3 = _reference(sim3, temp=1.0)
    assert loss3.shape == (N3,)
    assert jnp.allclose(loss3, ref3, atol=2e-3, rtol=2e-3), (loss3, ref3)

    print("KERNEL_OK")
</pallas_src>

<mosaic_0001>
module attributes {stable_mosaic.version = 11 : i64} {
  func.func @_fused_kernel(%arg0: memref<8x8xf32, #tpu.memory_space<vmem>>, %arg1: memref<8x1xf32, #tpu.memory_space<vmem>>) attributes {dimension_semantics = [], scalar_prefetch = 0 : i64, scratch_operands = 0 : i64, tpu.core_type = #tpu.core_type<tc>} {
    %c0 = arith.constant 0 : index
    %c0_0 = arith.constant 0 : index
    %0 = vector.load %arg0[%c0, %c0_0] : memref<8x8xf32, #tpu.memory_space<vmem>>, vector<8x8xf32>
    %cst = arith.constant 1.000000e-03 : f32
    %1 = vector.broadcast %cst : f32 to vector<8x8xf32>
    %2 = arith.mulf %0, %1 : vector<8x8xf32>
    %cst_1 = arith.constant dense<0xFF800000> : vector<8xf32>
    %3 = vector.multi_reduction <maximumf>, %2, %cst_1 [0] : vector<8x8xf32> to vector<8xf32>
    %4 = vector.shape_cast %3 : vector<8xf32> to vector<1x8xf32>
    %5 = vector.broadcast %4 : vector<1x8xf32> to vector<8x8xf32>
    %6 = arith.subf %2, %5 : vector<8x8xf32>
    %7 = math.exp %6 : vector<8x8xf32>
    %cst_2 = arith.constant dense<0.000000e+00> : vector<8xf32>
    %8 = vector.multi_reduction <add>, %7, %cst_2 [0] : vector<8x8xf32> to vector<8xf32>
    %9 = vector.shape_cast %8 : vector<8xf32> to vector<1x8xf32>
    %10 = tpu.reciprocal %9 {approx = true} : vector<1x8xf32> -> vector<1x8xf32>
    %11 = arith.mulf %9, %10 : vector<1x8xf32>
    %cst_3 = arith.constant 2.000000e+00 : f32
    %12 = vector.broadcast %cst_3 : f32 to vector<1x8xf32>
    %13 = arith.subf %12, %11 : vector<1x8xf32>
    %14 = arith.mulf %10, %13 : vector<1x8xf32>
    %cst_4 = arith.constant 8.000000e+00 : f32
    %15 = vector.broadcast %cst_4 : f32 to vector<1x8xf32>
    %16 = arith.mulf %14, %15 : vector<1x8xf32>
    %17 = vector.broadcast %16 : vector<1x8xf32> to vector<8x8xf32>
    %18 = arith.mulf %7, %17 : vector<8x8xf32>
    %19 = arith.mulf %0, %18 : vector<8x8xf32>
    %cst_5 = arith.constant dense<0xFF800000> : vector<8xf32>
    %20 = vector.multi_reduction <maximumf>, %19, %cst_5 [1] : vector<8x8xf32> to vector<8xf32>
    %21 = vector.shape_cast %20 : vector<8xf32> to vector<8x1xf32>
    %22 = vector.broadcast %21 : vector<8x1xf32> to vector<8x8xf32>
    %23 = arith.subf %19, %22 : vector<8x8xf32>
    %24 = math.exp %23 : vector<8x8xf32>
    %cst_6 = arith.constant dense<0.000000e+00> : vector<8xf32>
    %25 = vector.multi_reduction <add>, %24, %cst_6 [1] : vector<8x8xf32> to vector<8xf32>
    %26 = vector.shape_cast %25 : vector<8xf32> to vector<8x1xf32>
    %27 = math.log %26 : vector<8x1xf32>
    %28 = tpu.iota {dimensions = array<i32: 0>} : vector<8x8xi32>
    %29 = tpu.iota {dimensions = array<i32: 1>} : vector<8x8xi32>
    %30 = arith.cmpi eq, %28, %29 : vector<8x8xi32>
    %cst_7 = arith.constant 0.000000e+00 : f32
    %31 = vector.broadcast %cst_7 : f32 to vector<8x8xf32>
    %32 = arith.select %30, %19, %31 : vector<8x8xi1>, vector<8x8xf32>
    %cst_8 = arith.constant dense<0.000000e+00> : vector<8xf32>
    %33 = vector.multi_reduction <add>, %32, %cst_8 [1] : vector<8x8xf32> to vector<8xf32>
    %34 = vector.shape_cast %33 : vector<8xf32> to vector<8x1xf32>
    %35 = arith.subf %34, %21 : vector<8x1xf32>
    %36 = arith.subf %35, %27 : vector<8x1xf32>
    %cst_9 = arith.constant 0.000000e+00 : f32
    %37 = vector.broadcast %cst_9 : f32 to vector<8x1xf32>
    %38 = arith.subf %37, %36 : vector<8x1xf32>
    %c0_10 = arith.constant 0 : index
    %c0_11 = arith.constant 0 : index
    %39 = vector.load %arg1[%c0_10, %c0_11] : memref<8x1xf32, #tpu.memory_space<vmem>>, vector<8x1xf32>
    tpu.vector_store %arg1[%c0_10, %c0_11], %38 {strides = array<i32>} : memref<8x1xf32, #tpu.memory_space<vmem>>, vector<8x1xf32>,
    return
  }
}

</mosaic_0001>

<llo_original>
// kernel: tpu_custom_call.1
$region0: #{tpu_custom_call.1}
  #allocation0 [shape = 'u32[]', space=smem, size = 0x4, offset = 0x4, fixed_abs, tag = 'smem constant byte address 0x4 - core index']
  #allocation1 [shape = 'u32[144,128]{1,0:T(1,128)}', space=vmem, size = 0x12000, scoped, tag = 'internal scratch']
  %s0 = inlined_call_operand.hbm [shape: f32[8,8], index: 0, kind: input, shape index: {}]
  %s1 = inlined_call_operand.vmem [shape: f32[8,1], index: 1, kind: output, shape index: {}]
  %s2 = sld [smem:[#allocation0]]
  $region18: #{tpu_custom_call.1} parent=0
    _
  %s4 = ssub.s32 1, %s2
  %s5 = scalar_select 0, %s4, %s2
  $region1: #{tpu_custom_call.1} parent=0
    #allocation2 [shape = 'u8[4096]{0}', space=vmem, size = 0x1000, scoped, tag = 'input window, operand 0, single buffered']
    #allocation3 [shape = 's32[1]{0}', space=sflag, size = 0x4, scoped, tag = 'scoped memory for tpu_custom_call.1']
    %6 = vsyncpa [#allocation3], 0
    // Predicated region
    $region2: #{tpu_custom_call.1} parent=1 // pred_check
      _
    $region3: #{tpu_custom_call.1} parent=1 // pred_check_branch
      %8 = sbr.rel (0) target = $region5
    $region4: #{tpu_custom_call.1} parent=1 // pred_region
      %s10 = ssub.s32 128, 128
      %11 = vsyncadd [#allocation3], %s10
      %s13 = sshll.u32 [#allocation2], 4
      %s14 = int_to_ptr.vmem [resolvable:$true] %s13
      %16 = dma.hbm_to_vmem [thread:$0]  %s0, 128, %s14, [#allocation3]
    $region5: #{tpu_custom_call.1} parent=1 // pred_fallthru
      _
    // Predicated region
    $region6: #{tpu_custom_call.1} parent=1 // pred_check
      _
    $region7: #{tpu_custom_call.1} parent=1 // pred_check_branch
      %18 = sbr.rel (0) target = $region9
    $region8: #{tpu_custom_call.1} parent=1 // pred_region
      %19 = dma.done [#allocation3], 128
    $region9: #{tpu_custom_call.1} parent=1 // pred_fallthru
      _
    %v20 = vld [vmem:[#allocation2] sm:$0xff]
    %v21 = vmul.f32 %v20, 0.001
    %vm22 = vcmask 64512
    %v23 = vsel %vm22, %v21, -inf
    %v24 = vrot.slane %v23, 4
    %v25 = vmax.f32 %v23, %v24
    %v26 = vrot.slane %v25, 2
    %v27 = vmax.f32 %v25, %v26
    %v28 = vrot.slane %v27, 1
    %v29 = vmax.f32 %v27, %v28
    %v30 = vsub.f32 %v21, %v29
    %v31 = vmul.f32 %v30, 1.442695
    %v32 = vpow.pop %v31
    %v33 = vsel %vm22, %v32, 0.0
    %v34 = vrot.slane %v33, 4
    %v35 = vadd.f32 %v33, %v34
    %v36 = vrot.slane %v35, 2
    %v37 = vadd.f32 %v35, %v36
    %v38 = vrot.slane %v37, 1
    %v39 = vadd.f32 %v37, %v38
    %v40 = vrcp.pop %v39
    %v41 = vmul.f32 %v39, %v40
    %v42 = vsub.f32 2.0, %v41
    %v43 = vmul.f32 %v40, %v42
    %v44 = vmul.f32 %v43, 8.0
    %v45 = vmul.f32 %v32, %v44
    %v46 = vmul.f32 %v20, %v45
    %v47 = vsel %vm22, %v46, -inf
    %48 = vmax.xlane.f32.xlu0 %v47
    %v49 = vpop.xlane.xlu0 %48
    %v50 = vsub.f32 %v46, %v49
    %v51 = vmul.f32 %v50, 1.442695
    %v52 = vpow.pop %v51
    %v53 = vsel %vm22, %v52, 0.0
    %54 = vadd.xlane.f32.xlu0 %v53
    %v55 = vpop.xlane.xlu0 %54
    %v56 = vlog2.pop %v55
    %v57 = vmul.f32 %v56, 0.6931472
    %v58 = vlaneseq
    %v59 = vshrl.u32 %v58, 7
    %v60 = vlaneseq
    %v61 = vand.u32 %v60, 127
    %vm62 = vcmp.eq.s32.totalorder %v59, %v61
    %v63 = vsel %vm62, %v46, 0.0
    %v64 = vsel %vm22, %v63, 0.0
    %65 = vadd.xlane.f32.xlu0 %v64
    %v66 = vpop.xlane.xlu0 %65
    %v67 = vsub.f32 %v66, %v49
    %v68 = vsub.f32 %v67, %v57
    %v69 = vsub.f32 0.0, %v68
    %vm70 = vcmask 7168
    %71 = vst.msk [vmem:[%s1] sm:$0xff] %vm70, %v69
    // Predicated region
    $region10: #{tpu_custom_call.1} parent=1 // pred_check
      _
    $region11: #{tpu_custom_call.1} parent=1 // pred_check_branch
      %73 = sbr.rel (0) target = $region13
    $region12: #{tpu_custom_call.1} parent=1 // pred_region
      _
    $region13: #{tpu_custom_call.1} parent=1 // pred_fallthru
      _
    // Predicated region
    $region14: #{tpu_custom_call.1} parent=1 // pred_check
      _
    $region15: #{tpu_custom_call.1} parent=1 // pred_check_branch
      %75 = sbr.rel (0) target = $region17
    $region16: #{tpu_custom_call.1} parent=1 // pred_region
      _
    $region17: #{tpu_custom_call.1} parent=1 // pred_fallthru
      _
    %76 = vsyncpa [#allocation3], 1

</llo_original>
